<compile_context>
chip_gen: v5e
topology: v5e:2x2
jax: 0.10.0
libtpu: 0.0.40
codegen_flags: <defaults>
</compile_context>

<pallas_src>
import functools

import jax
import jax.numpy as jnp
from jax import lax
from jax.experimental import pallas as pl
from jax.experimental.pallas import tpu as pltpu

Q_MAX = 127.0  # 2**(8-1) - 1


def _round_up(x, m):
    return ((x + m - 1) // m) * m


def _cdiv(a, b):
    return -(-a // b)


def _vmem_limit_bytes():
    # Generation-aware VMEM budget: ~100 MiB on 128-MiB parts (v5e/v6e),
    # ~54 MiB on 64-MiB-per-core parts (v7x).
    try:
        cap = int(pltpu.get_tpu_info().vmem_capacity_bytes)
    except Exception:
        cap = 64 * 1024 * 1024
    return min(int(cap * 0.85), 100 * 1024 * 1024)


# ----------------------------------------------------------------------------
# Kernel 1: lane-dense per-(N,Cin) per-lane |x| maxima, straight off NCHW
# ----------------------------------------------------------------------------
def channel_lane_absmax(x_nchw, *, vmem_limit):
    """Returns (N, Cin, 128) per-lane partial |x| maxima (reduce over H*W lanes)."""
    N, C, H, W = x_nchw.shape
    R, HW = N * C, H * W
    x_flat = x_nchw.reshape(R, HW)                    # no transpose of x for this pass

    tile_r = min(_round_up(R, 8), 256)
    HW128 = _round_up(HW, 128)
    budget = max(1 << 20, (vmem_limit * 3) // 5)      # x tile is double-buffered

    def fits(tr, tl):
        return 2 * tr * tl * 4 <= budget

    # Prefer covering the whole row in one lane tile (no re-pad of x in HBM); shrink
    # the row tile first, fall back to lane chunking only if unavoidable.
    tile_l = min(HW128, 512 * 128)                    # cap in-kernel unroll depth
    while not fits(tile_r, tile_l) and tile_r > 8:
        tile_r = max(8, tile_r // 2)
    if not fits(tile_r, tile_l):
        tile_l = max(128, (budget // (2 * tile_r * 4)) // 128 * 128)

    Rp = _round_up(R, tile_r)
    HWp = _round_up(HW, tile_l)
    if (Rp, HWp) != (R, HW):                          # skip the pad copy when aligned
        # zero padding is harmless for an abs-max
        x_flat = jnp.pad(x_flat, ((0, Rp - R), (0, HWp - HW)))

    n_chunks = tile_l // 128
    n_acc = min(4, n_chunks)                          # independent max chains

    def kernel(x_ref, o_ref):
        @pl.when(pl.program_id(1) == 0)
        def _init():
            o_ref[...] = jnp.zeros_like(o_ref)

        # pure VPU elementwise max on 128-lane chunks; no cross-lane reduce here
        x = x_ref[...]
        accs = [jnp.abs(x[:, a * 128:(a + 1) * 128]) for a in range(n_acc)]
        for c in range(n_acc, n_chunks):
            a = c % n_acc
            accs[a] = jnp.maximum(accs[a], jnp.abs(x[:, c * 128:(c + 1) * 128]))
        m = accs[0]
        for a in range(1, n_acc):
            m = jnp.maximum(m, accs[a])
        o_ref[...] = jnp.maximum(o_ref[...], m)

    lane_max = pl.pallas_call(
        kernel,
        out_shape=jax.ShapeDtypeStruct((Rp, 128), jnp.float32),
        grid_spec=pltpu.PrefetchScalarGridSpec(
            num_scalar_prefetch=0,
            grid=(Rp // tile_r, HWp // tile_l),
            in_specs=[pl.BlockSpec((tile_r, tile_l), lambda i, j: (i, j))],
            out_specs=pl.BlockSpec((tile_r, 128), lambda i, j: (i, 0)),
        ),
        compiler_params=pltpu.CompilerParams(
            dimension_semantics=("parallel", "arbitrary"),
            vmem_limit_bytes=vmem_limit,
        ),
    )(x_flat)
    return lane_max[:R].reshape(N, C, 128)


# ----------------------------------------------------------------------------
# Kernel 2: row-tiled conv over the pre-quantized bf16 slab (no im2col)
# ----------------------------------------------------------------------------
def _choose_tile_oh(OH, N, OW, WP, Cin, KH, KW, cout_pad, elem_bytes, vmem_limit):
    def est(t):  # rough VMEM upper bound (lane/sublane padded, double-buffered)
        xb = (t + KH - 1) * N * _round_up(WP, 16) * _round_up(Cin, 128) * elem_bytes
        ob = t * N * _round_up(OW, 8) * cout_pad * 4
        wb = KH * _round_up(KW * Cin, 16) * cout_pad * elem_bytes
        return 2 * (xb + ob + wb)

    t = max(1, min(OH, _cdiv(256, max(1, N * OW))))   # target MXU M >= 256
    while t > 1 and _cdiv(OH, t) < 4:                 # keep >=4 steps (pipeline/megacore)
        t = (t + 1) // 2
    while t > 1 and est(t) > (vmem_limit * 7) // 10:  # VMEM guard
        t = (t + 1) // 2
    return t


def _conv_rowtile_matmul(x_tiles, w_taps, *, T, KH, KW, N, OW, WP, Cin, cout_pad,
                         vmem_limit):
    """x_tiles: (n_tiles, (T+KH-1)*N, WP, Cin) integer-valued (bf16/f32);
    w_taps: (KH, KW*Cin, Cout_pad) same dtype, act scale folded in."""
    n_tiles = x_tiles.shape[0]

    def kernel(x_ref, w_ref, o_ref):
        tile = x_ref[0].reshape(T + KH - 1, N, WP, Cin)     # already quantized rows
        # fold the KW taps into the contraction: K = KW*Cin, built once per tile
        q_cat = jnp.concatenate(
            [tile[:, :, kw:kw + OW, :] for kw in range(KW)], axis=-1
        )                                                    # (T+KH-1, N, OW, KW*Cin)
        for kh in range(KH):                                 # static unroll over KH taps
            lhs = q_cat[kh:kh + T].reshape(T * N * OW, KW * Cin)
            part = jnp.dot(lhs, w_ref[kh], preferred_element_type=jnp.float32)
            part = part.reshape(T, N, OW, cout_pad)
            # accumulate straight into the resident f32 output block (no big acc temp)
            if kh == 0:
                o_ref[...] = part
            else:
                o_ref[...] += part

    return pl.pallas_call(
        kernel,
        out_shape=jax.ShapeDtypeStruct((n_tiles * T, N, OW, cout_pad), jnp.float32),
        grid_spec=pltpu.PrefetchScalarGridSpec(
            num_scalar_prefetch=0,
            grid=(n_tiles,),
            in_specs=[
                pl.BlockSpec((1, (T + KH - 1) * N, WP, Cin),
                             lambda i: (i, 0, 0, 0)),
                # full weight stays VMEM-resident (constant block index => single DMA)
                # TODO(synk): pipeline_mode=pl.Buffered(1) (or a Cout grid axis) for very
                # large Cin*Cout on v7x so the resident weight is not double-buffered.
                pl.BlockSpec((KH, KW * Cin, cout_pad), lambda i: (0, 0, 0)),
            ],
            out_specs=pl.BlockSpec((T, N, OW, cout_pad), lambda i: (i, 0, 0, 0)),
        ),
        compiler_params=pltpu.CompilerParams(
            dimension_semantics=("parallel",),   # row tiles shard across TCs (v7x)
            vmem_limit_bytes=vmem_limit,
        ),
    )(x_tiles, w_taps)


# ----------------------------------------------------------------------------
# Wrapper
# ----------------------------------------------------------------------------
@functools.partial(jax.jit, static_argnames=("stride", "padding", "matmul_dtype"))
def smooth_conv2d_forward(x_nchw, weight_oihw, smooth_scales, *, stride=1, padding=1,
                          matmul_dtype=jnp.bfloat16):
    if stride != 1:
        raise NotImplementedError("stride != 1")
    # TODO(synk): bias / dilation / groups / padding_mode!='zeros' paths
    #             (module defaults: None / 1 / 1 / 'zeros').

    N, Cin, H, W = x_nchw.shape
    Cout, _, KH, KW = weight_oihw.shape
    OH = (H + 2 * padding - KH) // stride + 1
    OW = (W + 2 * padding - KW) // stride + 1
    compute_dtype = jnp.dtype(matmul_dtype)
    vmem_limit = _vmem_limit_bytes()

    x_nchw = x_nchw.astype(jnp.float32)
    inv_smooth = (1.0 / smooth_scales).astype(jnp.float32)

    # --- pass 1 (Pallas): per-tensor absmax of x / smooth_scales via channel maxima ---
    lane_max = channel_lane_absmax(x_nchw, vmem_limit=vmem_limit)   # (N, Cin, 128)
    chan_absmax = jnp.max(lane_max, axis=(0, 2))                    # (Cin,)   tiny glue
    absmax = jnp.max(chan_absmax * inv_smooth)                      # == max |x/s| (~1 ulp)
    scale = jnp.maximum(absmax, 1e-5) / Q_MAX                       # per-tensor act scale

    # --- quantize ONCE, fused into the relayout: integer-valued slab (H, N, W, Cin) ---
    # combined per-channel multiplier (1/smooth)*(1/scale): divide replaced by multiply
    q_mult = inv_smooth * (1.0 / scale)
    q = jnp.round(x_nchw * q_mult[None, :, None, None])             # ints in [-127, 127]
    q_t = jnp.transpose(q, (2, 0, 3, 1)).astype(compute_dtype)      # exact (|q| <= 127)

    cout_pad = _round_up(Cout, 128)                                 # lane-dense stores
    WP = W + 2 * padding
    T = _choose_tile_oh(OH, N, OW, WP, Cin, KH, KW, cout_pad,
                        compute_dtype.itemsize, vmem_limit)
    n_tiles = _cdiv(OH, T)
    HP = n_tiles * T + KH - 1                                       # padded rows needed

    q_pad = jnp.pad(q_t, ((padding, HP - H - padding), (0, 0),
                          (padding, padding), (0, 0)))
    # overlapping (T+KH-1)-row windows materialized once on the (half-size) slab
    # TODO(synk): replace with a manual-DMA KH-row ring buffer (memory_space=pl.ANY)
    #             to drop this gather copy and read x exactly once from HBM.
    row_idx = jnp.arange(n_tiles)[:, None] * T + jnp.arange(T + KH - 1)[None, :]
    x_tiles = q_pad[row_idx].reshape(n_tiles, (T + KH - 1) * N, WP, Cin)

    # weight -> (KH, KW*Cin, Cout_pad); per-tensor act scale folded in; cast once
    w_taps = jnp.transpose(weight_oihw, (2, 3, 1, 0)) * scale       # (KH, KW, Cin, Cout)
    w_taps = w_taps.reshape(KH, KW * Cin, Cout)
    w_taps = jnp.pad(w_taps, ((0, 0), (0, 0), (0, cout_pad - Cout)))
    w_taps = w_taps.astype(compute_dtype)

    y_t = _conv_rowtile_matmul(
        x_tiles, w_taps, T=T, KH=KH, KW=KW, N=N, OW=OW, WP=WP, Cin=Cin,
        cout_pad=cout_pad, vmem_limit=vmem_limit)                   # (n_tiles*T, N, OW, Cp)

    y = jnp.transpose(y_t[:OH, :, :, :Cout], (1, 3, 0, 2))          # -> NCHW
    return y  # output_quant = identity (quantize_output=False)


# ----------------------------------------------------------------------------
# Reference (plain JAX) for correctness check
# ----------------------------------------------------------------------------
def reference_forward(x, w, smooth_scales, stride=1, padding=1):
    s_x = x / smooth_scales[None, :, None, None]
    scale = jnp.maximum(jnp.max(jnp.abs(s_x)), 1e-5) / Q_MAX
    q_x = jnp.round(s_x / scale) * scale
    return lax.conv_general_dilated(
        q_x, w, window_strides=(stride, stride),
        padding=[(padding, padding), (padding, padding)],
        dimension_numbers=("NCHW", "OIHW", "NCHW"))


if __name__ == "__main__":
    key = jax.random.PRNGKey(0)
    k_x, k_w, k_s = jax.random.split(key, 3)

    N, Cin, H, W = 2, 4, 16, 16
    Cout, KH, KW = 8, 3, 3
    stride, padding = 1, 1

    x = jax.random.normal(k_x, (N, Cin, H, W), dtype=jnp.float32)
    weight = jax.random.normal(k_w, (Cout, Cin, KH, KW), dtype=jnp.float32)
    # positive smoothing scales (module default is ones; perturb deterministically)
    smooth_scales = jax.random.uniform(
        k_s, (Cin,), dtype=jnp.float32, minval=0.5, maxval=2.0)

    y = smooth_conv2d_forward(x, weight, smooth_scales, stride=stride, padding=padding)
    y = jax.block_until_ready(y)

    y_ref = reference_forward(x, weight, smooth_scales, stride, padding)
    assert y.shape == (N, Cout, H, W)
    # bf16 weights on the MXU (per perf review) => tolerance relaxed vs f32 reference;
    # the quantized LHS itself is integer-valued and exact in bf16.
    max_err = float(jnp.max(jnp.abs(y - y_ref)))
    assert jnp.allclose(y, y_ref, rtol=2e-2, atol=5e-2), max_err

    print("KERNEL_OK")
</pallas_src>

<mosaic_0001>
module attributes {stable_mosaic.version = 11 : i64} {
  func.func @kernel(%arg0: i32, %arg1: i32, %arg2: memref<8x256xf32, #tpu.memory_space<vmem>>, %arg3: memref<8x128xf32, #tpu.memory_space<vmem>>) attributes {dimension_semantics = [#tpu.dimension_semantics<parallel>, #tpu.dimension_semantics<arbitrary>], iteration_bounds = array<i64: 1, 1>, scalar_prefetch = 0 : i64, scratch_operands = 0 : i64, tpu.core_type = #tpu.core_type<tc>, window_params = [{transform_indices = @transform_0, window_bounds = array<i64: 8, 256>}, {transform_indices = @transform_1, window_bounds = array<i64: 8, 128>}]} {
    %c0_i32 = arith.constant 0 : i32
    %0 = arith.cmpi eq, %arg1, %c0_i32 : i32
    %1 = arith.extui %0 : i1 to i32
    %c0_i32_0 = arith.constant 0 : i32
    %2 = arith.cmpi ne, %1, %c0_i32_0 : i32
    scf.if %2 {
      %cst = arith.constant 0.000000e+00 : f32
      %12 = vector.broadcast %cst : f32 to vector<8x128xf32>
      %c0_6 = arith.constant 0 : index
      %c0_7 = arith.constant 0 : index
      %13 = vector.load %arg3[%c0_6, %c0_7] : memref<8x128xf32, #tpu.memory_space<vmem>>, vector<8x128xf32>
      tpu.vector_store %arg3[%c0_6, %c0_7], %12 {strides = array<i32>} : memref<8x128xf32, #tpu.memory_space<vmem>>, vector<8x128xf32>,
    } else {
    }
    %c0 = arith.constant 0 : index
    %c0_1 = arith.constant 0 : index
    %3 = vector.load %arg2[%c0, %c0_1] : memref<8x256xf32, #tpu.memory_space<vmem>>, vector<8x256xf32>
    %4 = vector.extract_strided_slice %3 {offsets = [0, 0], sizes = [8, 128], strides = [1, 1]} : vector<8x256xf32> to vector<8x128xf32>
    %5 = math.absf %4 : vector<8x128xf32>
    %6 = vector.extract_strided_slice %3 {offsets = [0, 128], sizes = [8, 128], strides = [1, 1]} : vector<8x256xf32> to vector<8x128xf32>
    %7 = math.absf %6 : vector<8x128xf32>
    %8 = arith.maximumf %5, %7 : vector<8x128xf32>
    %c0_2 = arith.constant 0 : index
    %c0_3 = arith.constant 0 : index
    %9 = vector.load %arg3[%c0_2, %c0_3] : memref<8x128xf32, #tpu.memory_space<vmem>>, vector<8x128xf32>
    %10 = arith.maximumf %9, %8 : vector<8x128xf32>
    %c0_4 = arith.constant 0 : index
    %c0_5 = arith.constant 0 : index
    %11 = vector.load %arg3[%c0_4, %c0_5] : memref<8x128xf32, #tpu.memory_space<vmem>>, vector<8x128xf32>
    tpu.vector_store %arg3[%c0_4, %c0_5], %10 {strides = array<i32>} : memref<8x128xf32, #tpu.memory_space<vmem>>, vector<8x128xf32>,
    return
  }
  func.func @transform_0(%arg0: i32, %arg1: i32) -> (i32, i32) {
    %c0_i32 = arith.constant 0 : i32
    return %arg0, %arg1 : i32, i32
  }
  func.func @transform_1(%arg0: i32, %arg1: i32) -> (i32, i32) {
    %c0_i32 = arith.constant 0 : i32
    %c0_i32_0 = arith.constant 0 : i32
    return %arg0, %c0_i32 : i32, i32
  }
}

module attributes {stable_mosaic.version = 11 : i64} {
  func.func @kernel(%arg0: i32, %arg1: memref<1x12x18x4xbf16, #tpu.memory_space<vmem>>, %arg2: memref<3x12x128xbf16, #tpu.memory_space<vmem>>, %arg3: memref<4x2x16x128xf32, #tpu.memory_space<vmem>>) attributes {dimension_semantics = [#tpu.dimension_semantics<parallel>], iteration_bounds = array<i64: 4>, scalar_prefetch = 0 : i64, scratch_operands = 0 : i64, tpu.core_type = #tpu.core_type<tc>, window_params = [{transform_indices = @transform_0, window_bounds = array<i64: 1, 12, 18, 4>}, {pipeline_mode = #tpu.pipeline_mode<synchronous>, transform_indices = @transform_1, window_bounds = array<i64: 3, 12, 128>}, {transform_indices = @transform_2, window_bounds = array<i64: 4, 2, 16, 128>}]} {
    %c0 = arith.constant 0 : index
    %c0_0 = arith.constant 0 : index
    %c0_1 = arith.constant 0 : index
    %c0_2 = arith.constant 0 : index
    %0 = vector.load %arg1[%c0, %c0_0, %c0_1, %c0_2] : memref<1x12x18x4xbf16, #tpu.memory_space<vmem>>, vector<1x12x18x4xbf16>
    %1 = vector.shape_cast %0 : vector<1x12x18x4xbf16> to vector<12x18x4xbf16>
    %2 = vector.shape_cast %1 : vector<12x18x4xbf16> to vector<6x2x18x4xbf16>
    %3 = vector.extract_strided_slice %2 {offsets = [0, 0, 0, 0], sizes = [6, 2, 16, 4], strides = [1, 1, 1, 1]} : vector<6x2x18x4xbf16> to vector<6x2x16x4xbf16>
    %4 = vector.extract_strided_slice %2 {offsets = [0, 0, 1, 0], sizes = [6, 2, 16, 4], strides = [1, 1, 1, 1]} : vector<6x2x18x4xbf16> to vector<6x2x16x4xbf16>
    %5 = vector.extract_strided_slice %2 {offsets = [0, 0, 2, 0], sizes = [6, 2, 16, 4], strides = [1, 1, 1, 1]} : vector<6x2x18x4xbf16> to vector<6x2x16x4xbf16>
    %6 = tpu.concatenate %3, %4, %5 in 3 : vector<6x2x16x4xbf16>, vector<6x2x16x4xbf16>, vector<6x2x16x4xbf16> -> vector<6x2x16x12xbf16>
    %7 = vector.extract_strided_slice %6 {offsets = [0, 0, 0, 0], sizes = [4, 2, 16, 12], strides = [1, 1, 1, 1]} : vector<6x2x16x12xbf16> to vector<4x2x16x12xbf16>
    %8 = vector.shape_cast %7 : vector<4x2x16x12xbf16> to vector<128x12xbf16>
    %c0_3 = arith.constant 0 : index
    %c0_4 = arith.constant 0 : index
    %c0_5 = arith.constant 0 : index
    %9 = vector.load %arg2[%c0_3, %c0_4, %c0_5] : memref<3x12x128xbf16, #tpu.memory_space<vmem>>, vector<1x12x128xbf16>
    %10 = vector.shape_cast %9 : vector<1x12x128xbf16> to vector<12x128xbf16>
    %cst = arith.constant dense<0.000000e+00> : vector<128x128xf32>
    %11 = tpu.matmul %8, %10, %cst {dimension_numbers = #tpu.dot_dimension_numbers<[1], [0], [0], [1], [0, 0, 1, 1], [], []>} : vector<128x12xbf16>, vector<12x128xbf16>, vector<128x128xf32> -> vector<128x128xf32>
    %12 = vector.shape_cast %11 : vector<128x128xf32> to vector<4x2x16x128xf32>
    %c0_6 = arith.constant 0 : index
    %c0_7 = arith.constant 0 : index
    %c0_8 = arith.constant 0 : index
    %c0_9 = arith.constant 0 : index
    %13 = vector.load %arg3[%c0_6, %c0_7, %c0_8, %c0_9] : memref<4x2x16x128xf32, #tpu.memory_space<vmem>>, vector<4x2x16x128xf32>
    tpu.vector_store %arg3[%c0_6, %c0_7, %c0_8, %c0_9], %12 {strides = array<i32>} : memref<4x2x16x128xf32, #tpu.memory_space<vmem>>, vector<4x2x16x128xf32>,
    %14 = vector.extract_strided_slice %6 {offsets = [1, 0, 0, 0], sizes = [4, 2, 16, 12], strides = [1, 1, 1, 1]} : vector<6x2x16x12xbf16> to vector<4x2x16x12xbf16>
    %15 = vector.shape_cast %14 : vector<4x2x16x12xbf16> to vector<128x12xbf16>
    %c1 = arith.constant 1 : index
    %c0_10 = arith.constant 0 : index
    %c0_11 = arith.constant 0 : index
    %16 = vector.load %arg2[%c1, %c0_10, %c0_11] : memref<3x12x128xbf16, #tpu.memory_space<vmem>>, vector<1x12x128xbf16>
    %17 = vector.shape_cast %16 : vector<1x12x128xbf16> to vector<12x128xbf16>
    %cst_12 = arith.constant dense<0.000000e+00> : vector<128x128xf32>
    %18 = tpu.matmul %15, %17, %cst_12 {dimension_numbers = #tpu.dot_dimension_numbers<[1], [0], [0], [1], [0, 0, 1, 1], [], []>} : vector<128x12xbf16>, vector<12x128xbf16>, vector<128x128xf32> -> vector<128x128xf32>
    %19 = vector.shape_cast %18 : vector<128x128xf32> to vector<4x2x16x128xf32>
    %c0_13 = arith.constant 0 : index
    %c0_14 = arith.constant 0 : index
    %c0_15 = arith.constant 0 : index
    %c0_16 = arith.constant 0 : index
    %20 = vector.load %arg3[%c0_13, %c0_14, %c0_15, %c0_16] : memref<4x2x16x128xf32, #tpu.memory_space<vmem>>, vector<4x2x16x128xf32>
    %21 = arith.addf %20, %19 : vector<4x2x16x128xf32>
    %c0_17 = arith.constant 0 : index
    %c0_18 = arith.constant 0 : index
    %c0_19 = arith.constant 0 : index
    %c0_20 = arith.constant 0 : index
    %22 = vector.load %arg3[%c0_17, %c0_18, %c0_19, %c0_20] : memref<4x2x16x128xf32, #tpu.memory_space<vmem>>, vector<4x2x16x128xf32>
    tpu.vector_store %arg3[%c0_17, %c0_18, %c0_19, %c0_20], %21 {strides = array<i32>} : memref<4x2x16x128xf32, #tpu.memory_space<vmem>>, vector<4x2x16x128xf32>,
    %23 = vector.extract_strided_slice %6 {offsets = [2, 0, 0, 0], sizes = [4, 2, 16, 12], strides = [1, 1, 1, 1]} : vector<6x2x16x12xbf16> to vector<4x2x16x12xbf16>
    %24 = vector.shape_cast %23 : vector<4x2x16x12xbf16> to vector<128x12xbf16>
    %c2 = arith.constant 2 : index
    %c0_21 = arith.constant 0 : index
    %c0_22 = arith.constant 0 : index
    %25 = vector.load %arg2[%c2, %c0_21, %c0_22] : memref<3x12x128xbf16, #tpu.memory_space<vmem>>, vector<1x12x128xbf16>
    %26 = vector.shape_cast %25 : vector<1x12x128xbf16> to vector<12x128xbf16>
    %cst_23 = arith.constant dense<0.000000e+00> : vector<128x128xf32>
    %27 = tpu.matmul %24, %26, %cst_23 {dimension_numbers = #tpu.dot_dimension_numbers<[1], [0], [0], [1], [0, 0, 1, 1], [], []>} : vector<128x12xbf16>, vector<12x128xbf16>, vector<128x128xf32> -> vector<128x128xf32>
    %28 = vector.shape_cast %27 : vector<128x128xf32> to vector<4x2x16x128xf32>
    %c0_24 = arith.constant 0 : index
    %c0_25 = arith.constant 0 : index
    %c0_26 = arith.constant 0 : index
    %c0_27 = arith.constant 0 : index
    %29 = vector.load %arg3[%c0_24, %c0_25, %c0_26, %c0_27] : memref<4x2x16x128xf32, #tpu.memory_space<vmem>>, vector<4x2x16x128xf32>
    %30 = arith.addf %29, %28 : vector<4x2x16x128xf32>
    %c0_28 = arith.constant 0 : index
    %c0_29 = arith.constant 0 : index
    %c0_30 = arith.constant 0 : index
    %c0_31 = arith.constant 0 : index
    %31 = vector.load %arg3[%c0_28, %c0_29, %c0_30, %c0_31] : memref<4x2x16x128xf32, #tpu.memory_space<vmem>>, vector<4x2x16x128xf32>
    tpu.vector_store %arg3[%c0_28, %c0_29, %c0_30, %c0_31], %30 {strides = array<i32>} : memref<4x2x16x128xf32, #tpu.memory_space<vmem>>, vector<4x2x16x128xf32>,
    return
  }
  func.func @transform_0(%arg0: i32) -> (i32, i32, i32, i32) {
    %c0_i32 = arith.constant 0 : i32
    %c0_i32_0 = arith.constant 0 : i32
    %c0_i32_1 = arith.constant 0 : i32
    %c0_i32_2 = arith.constant 0 : i32
    return %arg0, %c0_i32, %c0_i32_0, %c0_i32_1 : i32, i32, i32, i32
  }
  func.func @transform_1(%arg0: i32) -> (i32, i32, i32) {
    %c0_i32 = arith.constant 0 : i32
    %c0_i32_0 = arith.constant 0 : i32
    %c0_i32_1 = arith.constant 0 : i32
    %c0_i32_2 = arith.constant 0 : i32
    return %c0_i32, %c0_i32_0, %c0_i32_1 : i32, i32, i32
  }
  func.func @transform_2(%arg0: i32) -> (i32, i32, i32, i32) {
    %c0_i32 = arith.constant 0 : i32
    %c0_i32_0 = arith.constant 0 : i32
    %c0_i32_1 = arith.constant 0 : i32
    %c0_i32_2 = arith.constant 0 : i32
    return %arg0, %c0_i32, %c0_i32_0, %c0_i32_1 : i32, i32, i32, i32
  }
}

</mosaic_0001>

<llo_original>
// kernel: smooth_conv2d_forward.2
$region0: #{smooth_conv2d_forward.2}
  #allocation0 [shape = 'u32[]', space=smem, size = 0x4, offset = 0x4, fixed_abs, tag = 'smem constant byte address 0x4 - core index']
  #allocation1 [shape = 'u32[72,128]{1,0:T(1,128)}', space=vmem, size = 0x9000, scoped, tag = 'internal scratch']
  %s0 = inlined_call_operand.vmem [shape: f32[8,256], index: 0, kind: input, shape index: {}]
  %s1 = inlined_call_operand.vmem [shape: f32[8,128], index: 1, kind: output, shape index: {}]
  %s2 = sld [smem:[#allocation0]]
  $region18: #{smooth_conv2d_forward.2} parent=0
    _
  %s4 = ssub.s32 1, %s2
  %s5 = scalar_select 0, %s4, %s2
  // Predicated region
  $region2: #{smooth_conv2d_forward.2} parent=0 // pred_check
    _
  $region3: #{smooth_conv2d_forward.2} parent=0 // pred_check_branch
    %7 = sbr.rel (0) target = $region5
  $region4: #{smooth_conv2d_forward.2} parent=0 // pred_region
    _
  $region5: #{smooth_conv2d_forward.2} parent=0 // pred_fallthru
    _
  %p8 = scmp.eq.s32.totalorder 0, 0
  // Predicated region
  $region6: #{smooth_conv2d_forward.2} parent=0 // pred_check
    %p9 = pneg %p8
  $region7: #{smooth_conv2d_forward.2} parent=0 // pred_check_branch
    %11 = sbr.rel (%p9) target = $region9
  $region8: #{smooth_conv2d_forward.2} parent=0 // pred_region
    %12 = vst [vmem:[%s1] sm:$0xff] 0.0
  $region9: #{smooth_conv2d_forward.2} parent=0 // pred_fallthru
    _
  %v13 = vld [vmem:[%s0] sm:$0xff]
  %v14 = vld [vmem:[%s0 + $0x8] sm:$0xff]
  %v15 = vand.u32 2147483647, %v13
  %v16 = vand.u32 2147483647, %v14
  %v17 = vmax.f32 %v15, %v16
  %v18 = vld [vmem:[%s1] sm:$0xff]
  %v19 = vmax.f32 %v18, %v17
  %20 = vst [vmem:[%s1] sm:$0xff] %v19
  // Predicated region
  $region10: #{smooth_conv2d_forward.2} parent=0 // pred_check
    _
  $region11: #{smooth_conv2d_forward.2} parent=0 // pred_check_branch
    %22 = sbr.rel (0) target = $region13
  $region12: #{smooth_conv2d_forward.2} parent=0 // pred_region
    _
  $region13: #{smooth_conv2d_forward.2} parent=0 // pred_fallthru
    _
  // Predicated region
  $region14: #{smooth_conv2d_forward.2} parent=0 // pred_check
    _
  $region15: #{smooth_conv2d_forward.2} parent=0 // pred_check_branch
    %24 = sbr.rel (0) target = $region17
  $region16: #{smooth_conv2d_forward.2} parent=0 // pred_region
    _
  $region17: #{smooth_conv2d_forward.2} parent=0 // pred_fallthru
    _

// kernel: smooth_conv2d_forward.3
$region0: #{smooth_conv2d_forward.3}
  #allocation0 [shape = 'u32[]', space=smem, size = 0x4, offset = 0x4, fixed_abs, tag = 'smem constant byte address 0x4 - core index']
  #allocation1 [shape = 'u32[72,128]{1,0:T(1,128)}', space=vmem, size = 0x9000, scoped, tag = 'internal scratch']
  %s0 = inlined_call_operand.vmem [shape: bf16[4,12,18,4], index: 0, kind: input, shape index: {}]
  %s1 = inlined_call_operand.vmem [shape: bf16[3,12,128], index: 1, kind: input, shape index: {}]
  %s2 = inlined_call_operand.vmem [shape: f32[16,2,16,128], index: 2, kind: output, shape index: {}]
  %s3 = sld [smem:[#allocation0]]
  $region41: #{smooth_conv2d_forward.3} parent=0
    _
  %s5 = ssub.s32 1, %s3
  %s6 = scalar_select 0, %s5, %s3
  loop: start=0, step=1, limit=6
  $region2: #{smooth_conv2d_forward.3} parent=0 // loop_pre_header
    _
  $region3: #{smooth_conv2d_forward.3} parent=0 // loop_header
    %s8 = sphi 0, %s12
    %p9 = scmp.ge.s32.totalorder %s8, 6
    %s18 = sphi 0, %s20
    %s21 = sphi 0, %s18
    %s22 = sphi 0, %s21
    %s38 = sphi 0, %s22
    %s42 = sphi 0, %s42
    %s44 = sphi 0, %s42
    %s45 = sphi 0, %s44
    %s59 = sphi 0, %s45
    %s65 = sphi 0, %s67
    %s68 = sphi 0, %s65
    %s69 = sphi 0, %s68
    %s85 = sphi 0, %s69
  $region4: #{smooth_conv2d_forward.3} parent=0 // loop_header_branch
    %11 = sbr.rel (%p9) target = $region8
  $region5: #{smooth_conv2d_forward.3} parent=0 // loop_body
    %s13 = ssub.s32 %s8, 1
    %s14 = ssub.s32 %s8, 2
    %s15 = sadd.s32 %s8, 1
    %s16 = ssub.s32 %s8, %s15
    %p17 = scmp.eq.s32.totalorder %s16, 0
    %s19 = sadd.s32 %s18, 1
    %s20 = scalar_select %p17, %s18, %s19
    %p23 = pneg %p17
    %p24 = scmp.eq.s32.totalorder %s8, 3
    %p25 = por %p23, %p24
    %p26 = scmp.ne.s32.totalorder %s18, %s21
    %p27 = scmp.eq.s32.totalorder %s8, 0
    %p28 = por %p26, %p27
    %p29 = scmp.ne.s32.totalorder %s18, %s21
    %p30 = scmp.eq.s32.totalorder %s13, 3
    %p31 = por %p29, %p30
    %p32 = scmp.ne.s32.totalorder %s21, %s22
    %p33 = scmp.eq.s32.totalorder %s13, 0
    %p34 = por %p32, %p33
    %p35 = scmp.ne.s32.totalorder %s21, %s22
    %p36 = scmp.eq.s32.totalorder %s14, 3
    %p37 = por %p35, %p36
    %p39 = scmp.ne.s32.totalorder %s22, %s38
    %p40 = scmp.eq.s32.totalorder %s14, 0
    %p41 = por %p39, %p40
    %s43 = sadd.s32 %s42, 1
    %p46 = scmp.eq.s32.totalorder %s8, 3
    %p47 = scmp.ne.s32.totalorder %s42, %s44
    %p48 = scmp.eq.s32.totalorder %s8, 0
    %p49 = por %p47, %p48
    %p50 = scmp.ne.s32.totalorder %s42, %s44
    %p51 = scmp.eq.s32.totalorder %s13, 3
    %p52 = por %p50, %p51
    %p53 = scmp.ne.s32.totalorder %s44, %s45
    %p54 = scmp.eq.s32.totalorder %s13, 0
    %p55 = por %p53, %p54
    %p56 = scmp.ne.s32.totalorder %s44, %s45
    %p57 = scmp.eq.s32.totalorder %s14, 3
    %p58 = por %p56, %p57
    %p60 = scmp.ne.s32.totalorder %s45, %s59
    %p61 = scmp.eq.s32.totalorder %s14, 0
    %p62 = por %p60, %p61
    %s63 = ssub.s32 %s8, %s15
    %p64 = scmp.eq.s32.totalorder %s63, 0
    %s66 = sadd.s32 %s65, 1
    %s67 = scalar_select %p64, %s65, %s66
    %p70 = pneg %p64
    %p71 = scmp.eq.s32.totalorder %s8, 3
    %p72 = por %p70, %p71
    %p73 = scmp.ne.s32.totalorder %s65, %s68
    %p74 = scmp.eq.s32.totalorder %s8, 0
    %p75 = por %p73, %p74
    %p76 = scmp.ne.s32.totalorder %s65, %s68
    %p77 = scmp.eq.s32.totalorder %s13, 3
    %p78 = por %p76, %p77
    %p79 = scmp.ne.s32.totalorder %s68, %s69
    %p80 = scmp.eq.s32.totalorder %s13, 0
    %p81 = por %p79, %p80
    %p82 = scmp.ne.s32.totalorder %s68, %s69
    %p83 = scmp.eq.s32.totalorder %s14, 3
    %p84 = por %p82, %p83
    %p86 = scmp.ne.s32.totalorder %s69, %s85
    %p87 = scmp.eq.s32.totalorder %s14, 0
    %p88 = por %p86, %p87
    %p89 = scmp.le.s32.totalorder 1, %s8
    %p90 = scmp.lt.s32.totalorder %s8, 5
    %p91 = pnand %p89, %p90
    %p92 = pneg %p91
    // Predicated region
    $region9: #{smooth_conv2d_forward.3} parent=5 // pred_check
      _
    $region10: #{smooth_conv2d_forward.3} parent=5 // pred_check_branch
      %94 = sbr.rel (%p91) target = $region12
    $region11: #{smooth_conv2d_forward.3} parent=5 // pred_region
      %s95 = ssub.s32 %s8, 1
      // Predicated region
      $region13: #{smooth_conv2d_forward.3} parent=11 // pred_check
        %p96 = pneg %p55
      $region14: #{smooth_conv2d_forward.3} parent=11 // pred_check_branch
        %98 = sbr.rel (%p96) target = $region16
      $region15: #{smooth_conv2d_forward.3} parent=11 // pred_region
        _
      $region16: #{smooth_conv2d_forward.3} parent=11 // pred_fallthru
        _
    $region12: #{smooth_conv2d_forward.3} parent=5 // pred_fallthru
      _
    %p99 = scmp.lt.s32.totalorder %s8, 4
    // Predicated region
    $region17: #{smooth_conv2d_forward.3} parent=5 // pred_check
      %p100 = pneg %p99
    $region18: #{smooth_conv2d_forward.3} parent=5 // pred_check_branch
      %102 = sbr.rel (%p100) target = $region20
    $region19: #{smooth_conv2d_forward.3} parent=5 // pred_region
      // Predicated region
      $region21: #{smooth_conv2d_forward.3} parent=19 // pred_check
        %p103 = pneg %p28
      $region22: #{smooth_conv2d_forward.3} parent=19 // pred_check_branch
        %105 = sbr.rel (%p103) target = $region24
      $region23: #{smooth_conv2d_forward.3} parent=19 // pred_region
        %p106 = scmp.lt.s32.totalorder %s8, 3
        %s107 = scalar_select %p106, %s8, 3
        %s108 = smul.addr %s107, 36
        %s109 = smul.addr %s108, 4
        %s110 = scalar_lea.vmem %s0, %s109
      $region24: #{smooth_conv2d_forward.3} parent=19 // pred_fallthru
        _
    $region20: #{smooth_conv2d_forward.3} parent=5 // pred_fallthru
      _
    %p111 = scmp.le.s32.totalorder 1, %s8
    %p112 = scmp.lt.s32.totalorder %s8, 5
    %p113 = pnand %p111, %p112
    %p114 = pneg %p113
    // Predicated region
    $region25: #{smooth_conv2d_forward.3} parent=5 // pred_check
      _
    $region26: #{smooth_conv2d_forward.3} parent=5 // pred_check_branch
      %116 = sbr.rel (%p113) target = $region28
    $region27: #{smooth_conv2d_forward.3} parent=5 // pred_region
      %s117 = ssub.s32 %s8, 1
      %p118 = scmp.lt.s32.totalorder %s13, 3
      %s119 = scalar_select %p118, %s13, 3
      %s120 = smul.addr %s119, 36
      %s121 = smul.addr %s120, 4
      %s122 = scalar_lea.vmem %s0, %s121
      %p123 = pneg %p34
      %p124 = pneg %p31
      %p125 = pneg %p55
      %p126 = pneg %p52
      %p127 = pneg %p81
      %p128 = pneg %p78
      %s129 = smul.u32 4, %s13
      %p130 = scmp.lt.s32.totalorder %s129, 15
      %s131 = scalar_select %p130, %s129, 15
      %s132 = smul.addr %s131, 4
      %s133 = smul.addr %s132, 8
      %s134 = scalar_lea.vmem %s2, %s133
      %p135 = scmp.lt.s32.totalorder %s13, 3
      %s136 = scalar_select %p135, %s13, 3
      %s137 = smul.addr %s136, 36
      %s138 = smul.addr %s137, 4
      %s139 = scalar_lea.vmem %s0, %s138
      %s140 = smul.u32 4, %s13
      %p141 = scmp.lt.s32.totalorder %s140, 15
      %s142 = scalar_select %p141, %s140, 15
      %s143 = smul.addr %s142, 4
      %s144 = smul.addr %s143, 8
      %s145 = scalar_lea.vmem %s2, %s144
      %s146 = smul.u32 4, %s13
      %v148 = vld [vmem:[%s139] sm:$0xf]
      %v149 = vld [vmem:[%s139 + $0x4] sm:$0xf]
      %v150 = vld [vmem:[%s139 + $0x8] sm:$0x1]
      %v151 = vld [vmem:[%s139 + $0xc] sm:$0xf]
      %v152 = vld [vmem:[%s139 + $0x10] sm:$0xf]
      %v153 = vld [vmem:[%s139 + $0x14] sm:$0x1]
      %v154 = vld [vmem:[%s139 + $0x18] sm:$0xf]
      %v155 = vld [vmem:[%s139 + $0x1c] sm:$0xf]
      %v156 = vld [vmem:[%s139 + $0x20] sm:$0x1]
      %v157 = vld [vmem:[%s139 + $0x24] sm:$0xf]
      %v158 = vld [vmem:[%s139 + $0x28] sm:$0xf]
      %v159 = vld [vmem:[%s139 + $0x2c] sm:$0x1]
      %v160 = vld [vmem:[%s139 + $0x30] sm:$0xf]
      %v161 = vld [vmem:[%s139 + $0x34] sm:$0xf]
      %v162 = vld [vmem:[%s139 + $0x38] sm:$0x1]
      %v163 = vld [vmem:[%s139 + $0x3c] sm:$0xf]
      %v164 = vld [vmem:[%s139 + $0x40] sm:$0xf]
      %v165 = vld [vmem:[%s139 + $0x44] sm:$0x1]
      %v166 = vld [vmem:[%s139 + $0x48] sm:$0xf]
      %v167 = vld [vmem:[%s139 + $0x4c] sm:$0xf]
      %v168 = vld [vmem:[%s139 + $0x50] sm:$0x1]
      %v169 = vld [vmem:[%s139 + $0x54] sm:$0xf]
      %v170 = vld [vmem:[%s139 + $0x58] sm:$0xf]
      %v171 = vld [vmem:[%s139 + $0x5c] sm:$0x1]
      %v172 = vld [vmem:[%s139 + $0x60] sm:$0xf]
      %v173 = vld [vmem:[%s139 + $0x64] sm:$0xf]
      %v174 = vld [vmem:[%s139 + $0x68] sm:$0x1]
      %v175 = vld [vmem:[%s139 + $0x6c] sm:$0xf]
      %v176 = vld [vmem:[%s139 + $0x70] sm:$0xf]
      %v177 = vld [vmem:[%s139 + $0x74] sm:$0x1]
      %v178 = vld [vmem:[%s139 + $0x78] sm:$0xf]
      %v179 = vld [vmem:[%s139 + $0x7c] sm:$0xf]
      %v180 = vld [vmem:[%s139 + $0x80] sm:$0x1]
      %v181 = vld [vmem:[%s139 + $0x84] sm:$0xf]
      %v182 = vld [vmem:[%s139 + $0x88] sm:$0xf]
      %v183 = vld [vmem:[%s139 + $0x8c] sm:$0x1]
      %v208 = vunpack.c.l.b16 %v148
      %v209 = vunpack.c.l.b16 %v149
      %v210 = vunpack.c.l.b16 %v151
      %v211 = vunpack.c.l.b16 %v152
      %v212 = vunpack.c.l.b16 %v154
      %v213 = vunpack.c.l.b16 %v155
      %v214 = vunpack.c.l.b16 %v157
      %v215 = vunpack.c.l.b16 %v158
      %v216 = vunpack.c.l.b16 %v160
      %v217 = vunpack.c.l.b16 %v161
      %v218 = vunpack.c.l.b16 %v163
      %v219 = vunpack.c.l.b16 %v164
      %v220 = vunpack.c.l.b16 %v166
      %v221 = vunpack.c.l.b16 %v167
      %v222 = vunpack.c.l.b16 %v169
      %v223 = vunpack.c.l.b16 %v170
      %v224 = vunpack.c.l.b16 %v172
      %v225 = vunpack.c.l.b16 %v173
      %v226 = vunpack.c.l.b16 %v175
      %v227 = vunpack.c.l.b16 %v176
      %v228 = vunpack.c.l.b16 %v178
      %v229 = vunpack.c.l.b16 %v179
      %v230 = vunpack.c.l.b16 %v181
      %v231 = vunpack.c.l.b16 %v182
      %v232 = vpack.c.b16 %v209, %v208
      %v233 = vpack.c.b16 %v211, %v210
      %v234 = vpack.c.b16 %v213, %v212
      %v235 = vpack.c.b16 %v215, %v214
      %v236 = vpack.c.b16 %v217, %v216
      %v237 = vpack.c.b16 %v219, %v218
      %v238 = vpack.c.b16 %v221, %v220
      %v239 = vpack.c.b16 %v223, %v222
      %v240 = vpack.c.b16 %v225, %v224
      %v241 = vpack.c.b16 %v227, %v226
      %v242 = vpack.c.b16 %v229, %v228
      %v243 = vpack.c.b16 %v231, %v230
      %v256 = vunpack.c.l.b16 %v150
      %v257 = vunpack.c.l.b16 %v153
      %v258 = vunpack.c.l.b16 %v156
      %v259 = vunpack.c.l.b16 %v159
      %v260 = vunpack.c.l.b16 %v162
      %v261 = vunpack.c.l.b16 %v165
      %v262 = vunpack.c.l.b16 %v168
      %v263 = vunpack.c.l.b16 %v171
      %v264 = vunpack.c.l.b16 %v174
      %v265 = vunpack.c.l.b16 %v177
      %v266 = vunpack.c.l.b16 %v180
      %v267 = vunpack.c.l.b16 %v183
      %v268 = vpack.c.b16 %v256, %v256
      %v269 = vpack.c.b16 %v257, %v257
      %v270 = vpack.c.b16 %v258, %v258
      %v271 = vpack.c.b16 %v259, %v259
      %v272 = vpack.c.b16 %v260, %v260
      %v273 = vpack.c.b16 %v261, %v261
      %v274 = vpack.c.b16 %v262, %v262
      %v275 = vpack.c.b16 %v263, %v263
      %v276 = vpack.c.b16 %v264, %v264
      %v277 = vpack.c.b16 %v265, %v265
      %v278 = vpack.c.b16 %v266, %v266
      %v279 = vpack.c.b16 %v267, %v267
      %vm280 = vsmask.f32 7424
      %v282 = vshrl.u32 %v232, 16
      %v284 = vshll.u32 %v232, 16
      %v286 = vrot.slane %v284, 1
      %v287 = vor.u32 %v282, %v286
      %v289 = vshll.u32 %v268, 16
      %v291 = vrot.slane %v289, 1
      %v292 = vsel %vm280, %v287, %v291
      %v294 = vshrl.u32 %v233, 16
      %v296 = vshll.u32 %v233, 16
      %v298 = vrot.slane %v296, 1
      %v299 = vor.u32 %v294, %v298
      %v301 = vshll.u32 %v269, 16
      %v303 = vrot.slane %v301, 1
      %v304 = vsel %vm280, %v299, %v303
      %v306 = vshrl.u32 %v234, 16
      %v308 = vshll.u32 %v234, 16
      %v310 = vrot.slane %v308, 1
      %v311 = vor.u32 %v306, %v310
      %v313 = vshll.u32 %v270, 16
      %v315 = vrot.slane %v313, 1
      %v316 = vsel %vm280, %v311, %v315
      %v318 = vshrl.u32 %v235, 16
      %v320 = vshll.u32 %v235, 16
      %v322 = vrot.slane %v320, 1
      %v323 = vor.u32 %v318, %v322
      %v325 = vshll.u32 %v271, 16
      %v327 = vrot.slane %v325, 1
      %v328 = vsel %vm280, %v323, %v327
      %v330 = vshrl.u32 %v236, 16
      %v332 = vshll.u32 %v236, 16
      %v334 = vrot.slane %v332, 1
      %v335 = vor.u32 %v330, %v334
      %v337 = vshll.u32 %v272, 16
      %v339 = vrot.slane %v337, 1
      %v340 = vsel %vm280, %v335, %v339
      %v342 = vshrl.u32 %v237, 16
      %v344 = vshll.u32 %v237, 16
      %v346 = vrot.slane %v344, 1
      %v347 = vor.u32 %v342, %v346
      %v349 = vshll.u32 %v273, 16
      %v351 = vrot.slane %v349, 1
      %v352 = vsel %vm280, %v347, %v351
      %v354 = vshrl.u32 %v238, 16
      %v356 = vshll.u32 %v238, 16
      %v358 = vrot.slane %v356, 1
      %v359 = vor.u32 %v354, %v358
      %v361 = vshll.u32 %v274, 16
      %v363 = vrot.slane %v361, 1
      %v364 = vsel %vm280, %v359, %v363
      %v366 = vshrl.u32 %v239, 16
      %v368 = vshll.u32 %v239, 16
      %v370 = vrot.slane %v368, 1
      %v371 = vor.u32 %v366, %v370
      %v373 = vshll.u32 %v275, 16
      %v375 = vrot.slane %v373, 1
      %v376 = vsel %vm280, %v371, %v375
      %v378 = vshrl.u32 %v240, 16
      %v380 = vshll.u32 %v240, 16
      %v382 = vrot.slane %v380, 1
      %v383 = vor.u32 %v378, %v382
      %v385 = vshll.u32 %v276, 16
      %v387 = vrot.slane %v385, 1
      %v388 = vsel %vm280, %v383, %v387
      %v390 = vshrl.u32 %v241, 16
      %v392 = vshll.u32 %v241, 16
      %v394 = vrot.slane %v392, 1
      %v395 = vor.u32 %v390, %v394
      %v397 = vshll.u32 %v277, 16
      %v399 = vrot.slane %v397, 1
      %v400 = vsel %vm280, %v395, %v399
      %v402 = vshrl.u32 %v242, 16
      %v404 = vshll.u32 %v242, 16
      %v406 = vrot.slane %v404, 1
      %v407 = vor.u32 %v402, %v406
      %v409 = vshll.u32 %v278, 16
      %v411 = vrot.slane %v409, 1
      %v412 = vsel %vm280, %v407, %v411
      %v414 = vshrl.u32 %v243, 16
      %v416 = vshll.u32 %v243, 16
      %v418 = vrot.slane %v416, 1
      %v419 = vor.u32 %v414, %v418
      %v421 = vshll.u32 %v279, 16
      %v423 = vrot.slane %v421, 1
      %v424 = vsel %vm280, %v419, %v423
      %425 = vrot.lane.b32.xlu0 %v292, 4
      %v426 = vpop.permute.xlu0 %425
      %427 = vrot.lane.b32.xlu0 %v304, 4
      %v428 = vpop.permute.xlu0 %427
      %429 = vrot.lane.b32.xlu0 %v316, 4
      %v430 = vpop.permute.xlu0 %429
      %431 = vrot.lane.b32.xlu0 %v328, 4
      %v432 = vpop.permute.xlu0 %431
      %433 = vrot.lane.b32.xlu0 %v340, 4
      %v434 = vpop.permute.xlu0 %433
      %435 = vrot.lane.b32.xlu0 %v352, 4
      %v436 = vpop.permute.xlu0 %435
      %437 = vrot.lane.b32.xlu0 %v364, 4
      %v438 = vpop.permute.xlu0 %437
      %439 = vrot.lane.b32.xlu0 %v376, 4
      %v440 = vpop.permute.xlu0 %439
      %441 = vrot.lane.b32.xlu0 %v388, 4
      %v442 = vpop.permute.xlu0 %441
      %443 = vrot.lane.b32.xlu0 %v400, 4
      %v444 = vpop.permute.xlu0 %443
      %445 = vrot.lane.b32.xlu0 %v412, 4
      %v446 = vpop.permute.xlu0 %445
      %447 = vrot.lane.b32.xlu0 %v424, 4
      %v448 = vpop.permute.xlu0 %447
      %vm449 = vcmask 1046528
      %v450 = vrot.slane %v232, 1
      %v451 = vrot.slane %v268, 1
      %v452 = vsel %vm449, %v450, %v451
      %v453 = vrot.slane %v233, 1
      %v454 = vrot.slane %v269, 1
      %v455 = vsel %vm449, %v453, %v454
      %v456 = vrot.slane %v234, 1
      %v457 = vrot.slane %v270, 1
      %v458 = vsel %vm449, %v456, %v457
      %v459 = vrot.slane %v235, 1
      %v460 = vrot.slane %v271, 1
      %v461 = vsel %vm449, %v459, %v460
      %v462 = vrot.slane %v236, 1
      %v463 = vrot.slane %v272, 1
      %v464 = vsel %vm449, %v462, %v463
      %v465 = vrot.slane %v237, 1
      %v466 = vrot.slane %v273, 1
      %v467 = vsel %vm449, %v465, %v466
      %v468 = vrot.slane %v238, 1
      %v469 = vrot.slane %v274, 1
      %v470 = vsel %vm449, %v468, %v469
      %v471 = vrot.slane %v239, 1
      %v472 = vrot.slane %v275, 1
      %v473 = vsel %vm449, %v471, %v472
      %v474 = vrot.slane %v240, 1
      %v475 = vrot.slane %v276, 1
      %v476 = vsel %vm449, %v474, %v475
      %v477 = vrot.slane %v241, 1
      %v478 = vrot.slane %v277, 1
      %v479 = vsel %vm449, %v477, %v478
      %v480 = vrot.slane %v242, 1
      %v481 = vrot.slane %v278, 1
      %v482 = vsel %vm449, %v480, %v481
      %v483 = vrot.slane %v243, 1
      %v484 = vrot.slane %v279, 1
      %v485 = vsel %vm449, %v483, %v484
      %486 = vrot.lane.b32.xlu0 %v452, 8
      %v487 = vpop.permute.xlu0 %486
      %488 = vrot.lane.b32.xlu0 %v455, 8
      %v489 = vpop.permute.xlu0 %488
      %490 = vrot.lane.b32.xlu0 %v458, 8
      %v491 = vpop.permute.xlu0 %490
      %492 = vrot.lane.b32.xlu0 %v461, 8
      %v493 = vpop.permute.xlu0 %492
      %494 = vrot.lane.b32.xlu0 %v464, 8
      %v495 = vpop.permute.xlu0 %494
      %496 = vrot.lane.b32.xlu0 %v467, 8
      %v497 = vpop.permute.xlu0 %496
      %498 = vrot.lane.b32.xlu0 %v470, 8
      %v499 = vpop.permute.xlu0 %498
      %500 = vrot.lane.b32.xlu0 %v473, 8
      %v501 = vpop.permute.xlu0 %500
      %502 = vrot.lane.b32.xlu0 %v476, 8
      %v503 = vpop.permute.xlu0 %502
      %504 = vrot.lane.b32.xlu0 %v479, 8
      %v505 = vpop.permute.xlu0 %504
      %506 = vrot.lane.b32.xlu0 %v482, 8
      %v507 = vpop.permute.xlu0 %506
      %508 = vrot.lane.b32.xlu0 %v485, 8
      %v509 = vpop.permute.xlu0 %508
      %vm510 = vcmask 31744
      %v512 = vsel %vm510, %v232, %v426
      %v514 = vsel %vm510, %v233, %v428
      %v516 = vsel %vm510, %v234, %v430
      %v518 = vsel %vm510, %v235, %v432
      %v520 = vsel %vm510, %v236, %v434
      %v522 = vsel %vm510, %v237, %v436
      %v524 = vsel %vm510, %v238, %v438
      %v526 = vsel %vm510, %v239, %v440
      %v528 = vsel %vm510, %v240, %v442
      %v530 = vsel %vm510, %v241, %v444
      %v532 = vsel %vm510, %v242, %v446
      %v534 = vsel %vm510, %v243, %v448
      %vm535 = vcmask 64512
      %v537 = vsel %vm535, %v512, %v487
      %v539 = vsel %vm535, %v514, %v489
      %v541 = vsel %vm535, %v516, %v491
      %v543 = vsel %vm535, %v518, %v493
      %v545 = vsel %vm535, %v520, %v495
      %v547 = vsel %vm535, %v522, %v497
      %v549 = vsel %vm535, %v524, %v499
      %v551 = vsel %vm535, %v526, %v501
      %v553 = vsel %vm535, %v528, %v503
      %v555 = vsel %vm535, %v530, %v505
      %v557 = vsel %vm535, %v532, %v507
      %v559 = vsel %vm535, %v534, %v509
      %v560 = vld [vmem:[%s1] sm:$0xf]
      %v561 = vld [vmem:[%s1 + $0x4] sm:$0x3]
      %v564 = vunpack.c.l.b16 %v560
      %v565 = vunpack.c.l.b16 %v561
      %v566 = vpack.c.b16 %v565, %v564
      %vm567 = vcmask 97280
      %v568 = vsel %vm567, %v537, 0
      %v570 = vsel %vm567, %v539, 0
      %v572 = vsel %vm567, %v541, 0
      %v574 = vsel %vm567, %v543, 0
      %v576 = vsel %vm567, %v545, 0
      %v578 = vsel %vm567, %v547, 0
      %v580 = vsel %vm567, %v549, 0
      %v582 = vsel %vm567, %v551, 0
      %vm584 = vcmask 1045504
      %v586 = vsel %vm584, %v566, 0
      %588 = vmatpush.bf16.msra.mxu0 0
      %589 = vmatpush.bf16.msra.mxu0 0
      %590 = vmatpush.bf16.msra.mxu0 0
      %591 = vmatpush.bf16.msra.mxu0 0
      %592 = vmatpush.bf16.msra.mxu0 0
      %593 = vmatpush.bf16.msra.mxu0 0
      %594 = vmatpush.bf16.msra.mxu0 0
      %595 = vmatpush.bf16.msra.mxu0 %v586
      %596 = vmatmul.bf16.gmra.mxu0 %v568
      %v597 = vpop.f32.mrf.mxu0
      %v598 = vadd.f32 0.0, %v597
      %v599 = vpop.f32.mrf.mxu0
      %v600 = vadd.f32 0.0, %v599
      %601 = vmatmul.bf16.gmra.mxu0 %v570
      %v602 = vpop.f32.mrf.mxu0
      %v603 = vadd.f32 0.0, %v602
      %v604 = vpop.f32.mrf.mxu0
      %v605 = vadd.f32 0.0, %v604
      %606 = vmatmul.bf16.gmra.mxu0 %v572
      %v607 = vpop.f32.mrf.mxu0
      %v608 = vadd.f32 0.0, %v607
      %v609 = vpop.f32.mrf.mxu0
      %v610 = vadd.f32 0.0, %v609
      %611 = vmatmul.bf16.gmra.mxu0 %v574
      %v612 = vpop.f32.mrf.mxu0
      %v613 = vadd.f32 0.0, %v612
      %v614 = vpop.f32.mrf.mxu0
      %v615 = vadd.f32 0.0, %v614
      %616 = vmatmul.bf16.gmra.mxu0 %v576
      %v617 = vpop.f32.mrf.mxu0
      %v618 = vadd.f32 0.0, %v617
      %v619 = vpop.f32.mrf.mxu0
      %v620 = vadd.f32 0.0, %v619
      %621 = vmatmul.bf16.gmra.mxu0 %v578
      %v622 = vpop.f32.mrf.mxu0
      %v623 = vadd.f32 0.0, %v622
      %v624 = vpop.f32.mrf.mxu0
      %v625 = vadd.f32 0.0, %v624
      %626 = vmatmul.bf16.gmra.mxu0 %v580
      %v627 = vpop.f32.mrf.mxu0
      %v628 = vadd.f32 0.0, %v627
      %v629 = vpop.f32.mrf.mxu0
      %v630 = vadd.f32 0.0, %v629
      %631 = vmatmul.bf16.gmra.mxu0 %v582
      %v632 = vpop.f32.mrf.mxu0
      %v633 = vadd.f32 0.0, %v632
      %v634 = vpop.f32.mrf.mxu0
      %v635 = vadd.f32 0.0, %v634
      %636 = vdwg.mxu0
      %637 = vst [vmem:[%s145] sm:$0xff] %v598
      %638 = vst [vmem:[%s145 + $0x8] sm:$0xff] %v600
      %639 = vst [vmem:[%s145 + $0x10] sm:$0xff] %v603
      %640 = vst [vmem:[%s145 + $0x18] sm:$0xff] %v605
      %641 = vst [vmem:[%s145 + $0x20] sm:$0xff] %v608
      %642 = vst [vmem:[%s145 + $0x28] sm:$0xff] %v610
      %643 = vst [vmem:[%s145 + $0x30] sm:$0xff] %v613
      %644 = vst [vmem:[%s145 + $0x38] sm:$0xff] %v615
      %645 = vst [vmem:[%s145 + $0x40] sm:$0xff] %v618
      %646 = vst [vmem:[%s145 + $0x48] sm:$0xff] %v620
      %647 = vst [vmem:[%s145 + $0x50] sm:$0xff] %v623
      %648 = vst [vmem:[%s145 + $0x58] sm:$0xff] %v625
      %649 = vst [vmem:[%s145 + $0x60] sm:$0xff] %v628
      %650 = vst [vmem:[%s145 + $0x68] sm:$0xff] %v630
      %651 = vst [vmem:[%s145 + $0x70] sm:$0xff] %v633
      %652 = vst [vmem:[%s145 + $0x78] sm:$0xff] %v635
      %s653 = scalar_lea.vmem %s1, 8
      %v654 = vld [vmem:[%s653] sm:$0xf]
      %v655 = vld [vmem:[%s653 + $0x4] sm:$0x3]
      %v658 = vunpack.c.l.b16 %v654
      %v659 = vunpack.c.l.b16 %v655
      %v660 = vpack.c.b16 %v659, %v658
      %v661 = vsel %vm567, %v553, 0
      %v663 = vsel %vm567, %v555, 0
      %v666 = vsel %vm584, %v660, 0
      %668 = vmatpush.bf16.msra.mxu0 0
      %669 = vmatpush.bf16.msra.mxu0 0
      %670 = vmatpush.bf16.msra.mxu0 0
      %671 = vmatpush.bf16.msra.mxu0 0
      %672 = vmatpush.bf16.msra.mxu0 0
      %673 = vmatpush.bf16.msra.mxu0 0
      %674 = vmatpush.bf16.msra.mxu0 0
      %675 = vmatpush.bf16.msra.mxu0 %v666
      %676 = vmatmul.bf16.gmra.mxu0 %v572
      %v677 = vpop.f32.mrf.mxu0
      %v678 = vadd.f32 0.0, %v677
      %v679 = vpop.f32.mrf.mxu0
      %v680 = vadd.f32 0.0, %v679
      %681 = vmatmul.bf16.gmra.mxu0 %v574
      %v682 = vpop.f32.mrf.mxu0
      %v683 = vadd.f32 0.0, %v682
      %v684 = vpop.f32.mrf.mxu0
      %v685 = vadd.f32 0.0, %v684
      %686 = vmatmul.bf16.gmra.mxu0 %v576
      %v687 = vpop.f32.mrf.mxu0
      %v688 = vadd.f32 0.0, %v687
      %v689 = vpop.f32.mrf.mxu0
      %v690 = vadd.f32 0.0, %v689
      %691 = vmatmul.bf16.gmra.mxu0 %v578
      %v692 = vpop.f32.mrf.mxu0
      %v693 = vadd.f32 0.0, %v692
      %v694 = vpop.f32.mrf.mxu0
      %v695 = vadd.f32 0.0, %v694
      %696 = vmatmul.bf16.gmra.mxu0 %v580
      %v697 = vpop.f32.mrf.mxu0
      %v698 = vadd.f32 0.0, %v697
      %v699 = vpop.f32.mrf.mxu0
      %v700 = vadd.f32 0.0, %v699
      %701 = vmatmul.bf16.gmra.mxu0 %v582
      %v702 = vpop.f32.mrf.mxu0
      %v703 = vadd.f32 0.0, %v702
      %v704 = vpop.f32.mrf.mxu0
      %v705 = vadd.f32 0.0, %v704
      %706 = vmatmul.bf16.gmra.mxu0 %v661
      %v707 = vpop.f32.mrf.mxu0
      %v708 = vadd.f32 0.0, %v707
      %v709 = vpop.f32.mrf.mxu0
      %v710 = vadd.f32 0.0, %v709
      %711 = vmatmul.bf16.gmra.mxu0 %v663
      %v712 = vpop.f32.mrf.mxu0
      %v713 = vadd.f32 0.0, %v712
      %v714 = vpop.f32.mrf.mxu0
      %v715 = vadd.f32 0.0, %v714
      %716 = vdwg.mxu0
      %v717 = vld [vmem:[%s145] sm:$0xff]
      %v718 = vld [vmem:[%s145 + $0x8] sm:$0xff]
      %v719 = vld [vmem:[%s145 + $0x10] sm:$0xff]
      %v720 = vld [vmem:[%s145 + $0x18] sm:$0xff]
      %v721 = vld [vmem:[%s145 + $0x20] sm:$0xff]
      %v722 = vld [vmem:[%s145 + $0x28] sm:$0xff]
      %v723 = vld [vmem:[%s145 + $0x30] sm:$0xff]
      %v724 = vld [vmem:[%s145 + $0x38] sm:$0xff]
      %v725 = vld [vmem:[%s145 + $0x40] sm:$0xff]
      %v726 = vld [vmem:[%s145 + $0x48] sm:$0xff]
      %v727 = vld [vmem:[%s145 + $0x50] sm:$0xff]
      %v728 = vld [vmem:[%s145 + $0x58] sm:$0xff]
      %v729 = vld [vmem:[%s145 + $0x60] sm:$0xff]
      %v730 = vld [vmem:[%s145 + $0x68] sm:$0xff]
      %v731 = vld [vmem:[%s145 + $0x70] sm:$0xff]
      %v732 = vld [vmem:[%s145 + $0x78] sm:$0xff]
      %v733 = vadd.f32 %v717, %v678
      %v734 = vadd.f32 %v718, %v680
      %v735 = vadd.f32 %v719, %v683
      %v736 = vadd.f32 %v720, %v685
      %v737 = vadd.f32 %v721, %v688
      %v738 = vadd.f32 %v722, %v690
      %v739 = vadd.f32 %v723, %v693
      %v740 = vadd.f32 %v724, %v695
      %v741 = vadd.f32 %v725, %v698
      %v742 = vadd.f32 %v726, %v700
      %v743 = vadd.f32 %v727, %v703
      %v744 = vadd.f32 %v728, %v705
      %v745 = vadd.f32 %v729, %v708
      %v746 = vadd.f32 %v730, %v710
      %v747 = vadd.f32 %v731, %v713
      %v748 = vadd.f32 %v732, %v715
      %749 = vst [vmem:[%s145] sm:$0xff] %v733
      %750 = vst [vmem:[%s145 + $0x8] sm:$0xff] %v734
      %751 = vst [vmem:[%s145 + $0x10] sm:$0xff] %v735
      %752 = vst [vmem:[%s145 + $0x18] sm:$0xff] %v736
      %753 = vst [vmem:[%s145 + $0x20] sm:$0xff] %v737
      %754 = vst [vmem:[%s145 + $0x28] sm:$0xff] %v738
      %755 = vst [vmem:[%s145 + $0x30] sm:$0xff] %v739
      %756 = vst [vmem:[%s145 + $0x38] sm:$0xff] %v740
      %757 = vst [vmem:[%s145 + $0x40] sm:$0xff] %v741
      %758 = vst [vmem:[%s145 + $0x48] sm:$0xff] %v742
      %759 = vst [vmem:[%s145 + $0x50] sm:$0xff] %v743
      %760 = vst [vmem:[%s145 + $0x58] sm:$0xff] %v744
      %761 = vst [vmem:[%s145 + $0x60] sm:$0xff] %v745
      %762 = vst [vmem:[%s145 + $0x68] sm:$0xff] %v746
      %763 = vst [vmem:[%s145 + $0x70] sm:$0xff] %v747
      %764 = vst [vmem:[%s145 + $0x78] sm:$0xff] %v748
      %s765 = scalar_lea.vmem %s1, 16
      %v766 = vld [vmem:[%s765] sm:$0xf]
      %v767 = vld [vmem:[%s765 + $0x4] sm:$0x3]
      %v770 = vunpack.c.l.b16 %v766
      %v771 = vunpack.c.l.b16 %v767
      %v772 = vpack.c.b16 %v771, %v770
      %v773 = vsel %vm567, %v557, 0
      %v775 = vsel %vm567, %v559, 0
      %v778 = vsel %vm584, %v772, 0
      %780 = vmatpush.bf16.msra.mxu0 0
      %781 = vmatpush.bf16.msra.mxu0 0
      %782 = vmatpush.bf16.msra.mxu0 0
      %783 = vmatpush.bf16.msra.mxu0 0
      %784 = vmatpush.bf16.msra.mxu0 0
      %785 = vmatpush.bf16.msra.mxu0 0
      %786 = vmatpush.bf16.msra.mxu0 0
      %787 = vmatpush.bf16.msra.mxu0 %v778
      %788 = vmatmul.bf16.gmra.mxu0 %v576
      %v789 = vpop.f32.mrf.mxu0
      %v790 = vadd.f32 0.0, %v789
      %v791 = vpop.f32.mrf.mxu0
      %v792 = vadd.f32 0.0, %v791
      %793 = vmatmul.bf16.gmra.mxu0 %v578
      %v794 = vpop.f32.mrf.mxu0
      %v795 = vadd.f32 0.0, %v794
      %v796 = vpop.f32.mrf.mxu0
      %v797 = vadd.f32 0.0, %v796
      %798 = vmatmul.bf16.gmra.mxu0 %v580
      %v799 = vpop.f32.mrf.mxu0
      %v800 = vadd.f32 0.0, %v799
      %v801 = vpop.f32.mrf.mxu0
      %v802 = vadd.f32 0.0, %v801
      %803 = vmatmul.bf16.gmra.mxu0 %v582
      %v804 = vpop.f32.mrf.mxu0
      %v805 = vadd.f32 0.0, %v804
      %v806 = vpop.f32.mrf.mxu0
      %v807 = vadd.f32 0.0, %v806
      %808 = vmatmul.bf16.gmra.mxu0 %v661
      %v809 = vpop.f32.mrf.mxu0
      %v810 = vadd.f32 0.0, %v809
      %v811 = vpop.f32.mrf.mxu0
      %v812 = vadd.f32 0.0, %v811
      %813 = vmatmul.bf16.gmra.mxu0 %v663
      %v814 = vpop.f32.mrf.mxu0
      %v815 = vadd.f32 0.0, %v814
      %v816 = vpop.f32.mrf.mxu0
      %v817 = vadd.f32 0.0, %v816
      %818 = vmatmul.bf16.gmra.mxu0 %v773
      %v819 = vpop.f32.mrf.mxu0
      %v820 = vadd.f32 0.0, %v819
      %v821 = vpop.f32.mrf.mxu0
      %v822 = vadd.f32 0.0, %v821
      %823 = vmatmul.bf16.gmra.mxu0 %v775
      %v824 = vpop.f32.mrf.mxu0
      %v825 = vadd.f32 0.0, %v824
      %v826 = vpop.f32.mrf.mxu0
      %v827 = vadd.f32 0.0, %v826
      %828 = vdwg.mxu0
      %v829 = vld [vmem:[%s145] sm:$0xff]
      %v830 = vld [vmem:[%s145 + $0x8] sm:$0xff]
      %v831 = vld [vmem:[%s145 + $0x10] sm:$0xff]
      %v832 = vld [vmem:[%s145 + $0x18] sm:$0xff]
      %v833 = vld [vmem:[%s145 + $0x20] sm:$0xff]
      %v834 = vld [vmem:[%s145 + $0x28] sm:$0xff]
      %v835 = vld [vmem:[%s145 + $0x30] sm:$0xff]
      %v836 = vld [vmem:[%s145 + $0x38] sm:$0xff]
      %v837 = vld [vmem:[%s145 + $0x40] sm:$0xff]
      %v838 = vld [vmem:[%s145 + $0x48] sm:$0xff]
      %v839 = vld [vmem:[%s145 + $0x50] sm:$0xff]
      %v840 = vld [vmem:[%s145 + $0x58] sm:$0xff]
      %v841 = vld [vmem:[%s145 + $0x60] sm:$0xff]
      %v842 = vld [vmem:[%s145 + $0x68] sm:$0xff]
      %v843 = vld [vmem:[%s145 + $0x70] sm:$0xff]
      %v844 = vld [vmem:[%s145 + $0x78] sm:$0xff]
      %v845 = vadd.f32 %v829, %v790
      %v846 = vadd.f32 %v830, %v792
      %v847 = vadd.f32 %v831, %v795
      %v848 = vadd.f32 %v832, %v797
      %v849 = vadd.f32 %v833, %v800
      %v850 = vadd.f32 %v834, %v802
      %v851 = vadd.f32 %v835, %v805
      %v852 = vadd.f32 %v836, %v807
      %v853 = vadd.f32 %v837, %v810
      %v854 = vadd.f32 %v838, %v812
      %v855 = vadd.f32 %v839, %v815
      %v856 = vadd.f32 %v840, %v817
      %v857 = vadd.f32 %v841, %v820
      %v858 = vadd.f32 %v842, %v822
      %v859 = vadd.f32 %v843, %v825
      %v860 = vadd.f32 %v844, %v827
      %861 = vst [vmem:[%s145] sm:$0xff] %v845
      %862 = vst [vmem:[%s145 + $0x8] sm:$0xff] %v846
      %863 = vst [vmem:[%s145 + $0x10] sm:$0xff] %v847
      %864 = vst [vmem:[%s145 + $0x18] sm:$0xff] %v848
      %865 = vst [vmem:[%s145 + $0x20] sm:$0xff] %v849
      %866 = vst [vmem:[%s145 + $0x28] sm:$0xff] %v850
      %867 = vst [vmem:[%s145 + $0x30] sm:$0xff] %v851
      %868 = vst [vmem:[%s145 + $0x38] sm:$0xff] %v852
      %869 = vst [vmem:[%s145 + $0x40] sm:$0xff] %v853
      %870 = vst [vmem:[%s145 + $0x48] sm:$0xff] %v854
      %871 = vst [vmem:[%s145 + $0x50] sm:$0xff] %v855
      %872 = vst [vmem:[%s145 + $0x58] sm:$0xff] %v856
      %873 = vst [vmem:[%s145 + $0x60] sm:$0xff] %v857
      %874 = vst [vmem:[%s145 + $0x68] sm:$0xff] %v858
      %875 = vst [vmem:[%s145 + $0x70] sm:$0xff] %v859
      %876 = vst [vmem:[%s145 + $0x78] sm:$0xff] %v860
      %s877 = smul.u32 4, %s13
      %p878 = scmp.lt.s32.totalorder %s877, 15
      %s879 = scalar_select %p878, %s877, 15
      %s880 = smul.addr %s879, 4
      %s881 = smul.addr %s880, 8
      %s882 = scalar_lea.vmem %s2, %s881
      // Predicated region
      $region29: #{smooth_conv2d_forward.3} parent=27 // pred_check
        %p883 = pneg %p78
      $region30: #{smooth_conv2d_forward.3} parent=27 // pred_check_branch
        %885 = sbr.rel (%p883) target = $region32
      $region31: #{smooth_conv2d_forward.3} parent=27 // pred_region
        %s886 = smul.u32 4, %s13
      $region32: #{smooth_conv2d_forward.3} parent=27 // pred_fallthru
        _
    $region28: #{smooth_conv2d_forward.3} parent=5 // pred_fallthru
      _
    %p887 = scmp.le.s32.totalorder 2, %s8
    // Predicated region
    $region33: #{smooth_conv2d_forward.3} parent=5 // pred_check
      %p888 = pneg %p887
    $region34: #{smooth_conv2d_forward.3} parent=5 // pred_check_branch
      %890 = sbr.rel (%p888) target = $region36
    $region35: #{smooth_conv2d_forward.3} parent=5 // pred_region
      %s891 = ssub.s32 %s8, 2
      // Predicated region
      $region37: #{smooth_conv2d_forward.3} parent=35 // pred_check
        %p892 = pneg %p84
      $region38: #{smooth_conv2d_forward.3} parent=35 // pred_check_branch
        %894 = sbr.rel (%p892) target = $region40
      $region39: #{smooth_conv2d_forward.3} parent=35 // pred_region
        %s895 = smul.u32 4, %s14
        %p896 = scmp.lt.s32.totalorder %s895, 15
        %s897 = scalar_select %p896, %s895, 15
        %s898 = smul.addr %s897, 4
        %s899 = smul.addr %s898, 8
        %s900 = scalar_lea.vmem %s2, %s899
      $region40: #{smooth_conv2d_forward.3} parent=35 // pred_fallthru
        _
    $region36: #{smooth_conv2d_forward.3} parent=5 // pred_fallthru
      _
  $region6: #{smooth_conv2d_forward.3} parent=0 // loop_footer
    %s12 = sadd.s32 1, %s8
  $region7: #{smooth_conv2d_forward.3} parent=0 // loop_footer_branch
    %7 = sbr.rel target = $region3
  $region8: #{smooth_conv2d_forward.3} parent=0 // loop_exit
    _

</llo_original>
